<compile_context>
chip_gen: v6e
topology: v6e:2x2x1
jax: 0.10.0
libtpu: 0.0.40
codegen_flags: <defaults>
</compile_context>

<pallas_src>
import jax
import jax.numpy as jnp
from jax.experimental import pallas as pl
from jax.experimental.pallas import tpu as pltpu


def _smooth_loss_kernel(x_ref, m_ref, out_ref):
    tb, H, W = x_ref.shape

    # Boundary weights shared by every plane in the block.
    r = jax.lax.broadcasted_iota(jnp.int32, (H, W), 0)
    c = jax.lax.broadcasted_iota(jnp.int32, (H, W), 1)
    col_ge1 = (c >= 1).astype(jnp.float32)
    row_ge1 = (r >= 1).astype(jnp.float32)
    row_ge2 = (r >= 2).astype(jnp.float32)
    row_int = ((r >= 1) & (r <= H - 2)).astype(jnp.float32)
    col_first = (c == 0).astype(jnp.float32)
    col_last = (c == W - 1).astype(jnp.float32)
    edge_w = col_last + row_int * (col_first + col_last)

    def plane(b, carry):
        acc, cnt = carry
        x = x_ref[b].astype(jnp.float32)        # (H, W)
        mf = m_ref[b].astype(jnp.float32)       # (H, W), {0, 1}

        # Lane / sublane rotations instead of offset slices (stay lane-dense).
        x_w1 = pltpu.roll(x, 1, axis=1)         # x[h,   w-1]
        x_h1 = pltpu.roll(x, 1, axis=0)         # x[h-1, w  ]
        x_hw = pltpu.roll(x_w1, 1, axis=0)      # x[h-1, w-1]
        m_h1 = pltpu.roll(mf, 1, axis=0)        # m[h-1, w  ]
        m_hw = pltpu.roll(m_h1, 1, axis=1)      # m[h-1, w-1]

        dh = jnp.abs(x - x_w1)                  # horizontal diff
        dv = jnp.abs(x - x_h1)                  # vertical diff
        dd = jnp.abs(x - x_hw)                  # diagonal diff
        ax = jnp.abs(x)

        term = dh * (mf * col_ge1)                                      # x_r
        term = term + dv * ((mf + m_h1) * row_ge1)                      # x_b + x_t
        term = term + dd * ((mf * row_ge1 + m_hw * row_ge2) * col_ge1)  # x_rb + x_lb interior
        term = term + ax * (mf * edge_w)                                # x_l + x_rt + x_lb edges
        return acc + term, cnt + mf

    zero = jnp.zeros((H, W), jnp.float32)
    acc, cnt = jax.lax.fori_loop(0, tb, plane, (zero, zero), unroll=True)

    # Single fused reduction per grid step.
    s = jnp.sum(acc)
    n = jnp.sum(cnt)

    # Lane-dense (1, 128) partial block: lane 0 = masked diff sum, lane 1 = count.
    lane = jax.lax.broadcasted_iota(jnp.int32, (1, 128), 1)
    out_ref[...] = jnp.where(lane == 0, s, 0.0) + jnp.where(lane == 1, n, 0.0)


def smooth_loss_pallas(x, mask):
    B, H, W = x.shape
    m = mask.astype(jnp.int8)   # torch mask is boolean; 1 B/elem over HBM

    # Batch tile: ~2 MiB of x per grid step, but keep >= 2 parallel steps
    # when B allows it (v7x has 2 TensorCores sharing the parallel grid axis).
    itemsize = jnp.dtype(x.dtype).itemsize
    tile_b = max(1, (2 * 1024 * 1024) // (H * W * itemsize))
    if B >= 2:
        tile_b = min(tile_b, pl.cdiv(B, 2))
    tile_b = min(tile_b, B)

    n_steps = pl.cdiv(B, tile_b)
    b_pad = n_steps * tile_b
    if b_pad != B:   # zero-padded planes carry mask == 0 -> contribute nothing
        x = jnp.pad(x, ((0, b_pad - B), (0, 0), (0, 0)))
        m = jnp.pad(m, ((0, b_pad - B), (0, 0), (0, 0)))

    partials = pl.pallas_call(
        _smooth_loss_kernel,
        out_shape=jax.ShapeDtypeStruct((n_steps, 1, 128), jnp.float32),
        grid=(n_steps,),
        in_specs=[
            pl.BlockSpec((tile_b, H, W), lambda i: (i, 0, 0)),
            pl.BlockSpec((tile_b, H, W), lambda i: (i, 0, 0)),
        ],
        out_specs=pl.BlockSpec((None, 1, 128), lambda i: (i, 0, 0)),
        compiler_params=pltpu.CompilerParams(
            dimension_semantics=("parallel",),
            vmem_limit_bytes=32 * 1024 * 1024),
    )(x, m)

    totals = jnp.sum(partials, axis=(0, 1))   # lane 0 = diff sum, lane 1 = count
    return totals[0] / totals[1] / 8.0


def smooth_loss_ref(x, mask):
    """Pure-JAX mirror of the PyTorch code (for verification)."""
    x = x.astype(jnp.float32)
    mf = mask.astype(jnp.float32)
    cnt = jnp.sum(mf)

    def abs_mean(a, b):
        return jnp.sum(jnp.abs(a - b) * mf) / cnt

    x_r = jnp.pad(x[:, :, :-1], ((0, 0), (0, 0), (1, 0)))
    x_r = x_r.at[:, :, 0].set(x[:, :, 0])
    t_r = abs_mean(x, x_r)
    x_l = jnp.pad(x[:, :, 1:], ((0, 0), (0, 0), (0, 1)))
    x_l = x_l.at[..., :-1].set(x[..., :-1])
    t_l = abs_mean(x, x_l)
    x_b = jnp.pad(x[:, :-1, :], ((0, 0), (1, 0), (0, 0)))
    x_b = x_b.at[:, 0, :].set(x[:, 0, :])
    t_b = abs_mean(x, x_b)
    x_t = jnp.pad(x[:, 1:, :], ((0, 0), (0, 1), (0, 0)))
    x_t = x_t.at[:, -1, :].set(x[:, -1, :])
    t_t = abs_mean(x, x_t)
    x_rb = jnp.pad(x[:, :-1, :-1], ((0, 0), (1, 0), (1, 0)))
    x_rb = x_rb.at[:, 0, :].set(x[:, 0, :])
    x_rb = x_rb.at[:, :, 0].set(x[:, :, 0])
    t_rb = abs_mean(x, x_rb)
    x_rt = jnp.pad(x[:, :-1, 1:], ((0, 0), (0, 1), (1, 0)))
    x_rt = x_rt.at[:, 0, :].set(x[:, 0, :])
    x_rt = x_rt.at[:, -1, :].set(x[:, -1, :])
    t_rt = abs_mean(x, x_rt)
    # first x_lb in the torch code is discarded (overwritten before use)
    x_lb = jnp.pad(x[:, 1:, 1:], ((0, 0), (0, 1), (0, 1)))
    x_lb = x_lb.at[:, -1, :].set(x[:, -1, :])
    x_lb = x_lb.at[:, 0, :].set(x[:, 0, :])
    t_lb = abs_mean(x, x_lb)
    return (t_b + t_l + t_lb + t_r + t_rb + t_rt + t_t) / 8.0


if __name__ == "__main__":
    key = jax.random.PRNGKey(0)
    k1, k2 = jax.random.split(key)
    B, H, W = 4, 32, 128
    x = jax.random.normal(k1, (B, H, W), dtype=jnp.float32)
    mask = jax.random.uniform(k2, (B, H, W)) > 0.3

    out = smooth_loss_pallas(x, mask)
    out = jax.block_until_ready(out)

    ref = smooth_loss_ref(x, mask)
    assert jnp.allclose(out, ref, rtol=1e-4, atol=1e-6), (out, ref)
    print("KERNEL_OK")
</pallas_src>

<mosaic_0001>
module attributes {stable_mosaic.version = 11 : i64} {
  func.func @_smooth_loss_kernel(%arg0: i32, %arg1: memref<2x32x128xf32, #tpu.memory_space<vmem>>, %arg2: memref<2x32x128xi8, #tpu.memory_space<vmem>>, %arg3: memref<1x1x128xf32, #tpu.memory_space<vmem>>) attributes {dimension_semantics = [#tpu.dimension_semantics<parallel>], iteration_bounds = array<i64: 2>, scalar_prefetch = 0 : i64, scratch_operands = 0 : i64, tpu.core_type = #tpu.core_type<tc>, window_params = [{transform_indices = @transform_0, window_bounds = array<i64: 2, 32, 128>}, {transform_indices = @transform_1, window_bounds = array<i64: 2, 32, 128>}, {transform_indices = @transform_2, window_bounds = array<i64: 1, 1, 128>}]} {
    %0 = tpu.iota {dimensions = array<i32: 0>} : vector<32x128xi32>
    %1 = tpu.iota {dimensions = array<i32: 1>} : vector<32x128xi32>
    %c1_i32 = arith.constant 1 : i32
    %2 = vector.broadcast %c1_i32 : i32 to vector<32x128xi32>
    %3 = arith.cmpi sge, %1, %2 : vector<32x128xi32>
    %4 = arith.extui %3 : vector<32x128xi1> to vector<32x128xi32>
    %5 = arith.sitofp %4 : vector<32x128xi32> to vector<32x128xf32>
    %c1_i32_0 = arith.constant 1 : i32
    %6 = vector.broadcast %c1_i32_0 : i32 to vector<32x128xi32>
    %7 = arith.cmpi sge, %0, %6 : vector<32x128xi32>
    %8 = arith.extui %7 : vector<32x128xi1> to vector<32x128xi32>
    %9 = arith.sitofp %8 : vector<32x128xi32> to vector<32x128xf32>
    %c2_i32 = arith.constant 2 : i32
    %10 = vector.broadcast %c2_i32 : i32 to vector<32x128xi32>
    %11 = arith.cmpi sge, %0, %10 : vector<32x128xi32>
    %12 = arith.extui %11 : vector<32x128xi1> to vector<32x128xi32>
    %13 = arith.sitofp %12 : vector<32x128xi32> to vector<32x128xf32>
    %c1_i32_1 = arith.constant 1 : i32
    %14 = vector.broadcast %c1_i32_1 : i32 to vector<32x128xi32>
    %15 = arith.cmpi sge, %0, %14 : vector<32x128xi32>
    %c30_i32 = arith.constant 30 : i32
    %16 = vector.broadcast %c30_i32 : i32 to vector<32x128xi32>
    %17 = arith.cmpi sle, %0, %16 : vector<32x128xi32>
    %18 = arith.andi %15, %17 : vector<32x128xi1>
    %19 = arith.extui %18 : vector<32x128xi1> to vector<32x128xi32>
    %20 = arith.sitofp %19 : vector<32x128xi32> to vector<32x128xf32>
    %c0_i32 = arith.constant 0 : i32
    %21 = vector.broadcast %c0_i32 : i32 to vector<32x128xi32>
    %22 = arith.cmpi eq, %1, %21 : vector<32x128xi32>
    %23 = arith.extui %22 : vector<32x128xi1> to vector<32x128xi32>
    %24 = arith.sitofp %23 : vector<32x128xi32> to vector<32x128xf32>
    %c127_i32 = arith.constant 127 : i32
    %25 = vector.broadcast %c127_i32 : i32 to vector<32x128xi32>
    %26 = arith.cmpi eq, %1, %25 : vector<32x128xi32>
    %27 = arith.extui %26 : vector<32x128xi1> to vector<32x128xi32>
    %28 = arith.sitofp %27 : vector<32x128xi32> to vector<32x128xf32>
    %29 = arith.addf %24, %28 : vector<32x128xf32>
    %30 = arith.mulf %20, %29 : vector<32x128xf32>
    %31 = arith.addf %28, %30 : vector<32x128xf32>
    %cst = arith.constant 0.000000e+00 : f32
    %32 = vector.broadcast %cst : f32 to vector<32x128xf32>
    %c0_i32_2 = arith.constant 0 : i32
    %33 = arith.index_cast %c0_i32_2 : i32 to index
    %c0 = arith.constant 0 : index
    %c0_3 = arith.constant 0 : index
    %34 = vector.load %arg1[%33, %c0, %c0_3] : memref<2x32x128xf32, #tpu.memory_space<vmem>>, vector<1x32x128xf32>
    %35 = vector.shape_cast %34 : vector<1x32x128xf32> to vector<32x128xf32>
    %36 = arith.index_cast %c0_i32_2 : i32 to index
    %c0_4 = arith.constant 0 : index
    %c0_5 = arith.constant 0 : index
    %37 = vector.load %arg2[%36, %c0_4, %c0_5] : memref<2x32x128xi8, #tpu.memory_space<vmem>>, vector<1x32x128xi8>
    %38 = vector.shape_cast %37 : vector<1x32x128xi8> to vector<32x128xi8>
    %39 = arith.sitofp %38 : vector<32x128xi8> to vector<32x128xf32>
    %c1_i32_6 = arith.constant 1 : i32
    %40 = tpu.dynamic_rotate %35 by %c1_i32_6 dim 1 : vector<32x128xf32>, i32 -> vector<32x128xf32>
    %c1_i32_7 = arith.constant 1 : i32
    %41 = tpu.dynamic_rotate %35 by %c1_i32_7 dim 0 : vector<32x128xf32>, i32 -> vector<32x128xf32>
    %c1_i32_8 = arith.constant 1 : i32
    %42 = tpu.dynamic_rotate %40 by %c1_i32_8 dim 0 : vector<32x128xf32>, i32 -> vector<32x128xf32>
    %c1_i32_9 = arith.constant 1 : i32
    %43 = tpu.dynamic_rotate %39 by %c1_i32_9 dim 0 : vector<32x128xf32>, i32 -> vector<32x128xf32>
    %c1_i32_10 = arith.constant 1 : i32
    %44 = tpu.dynamic_rotate %43 by %c1_i32_10 dim 1 : vector<32x128xf32>, i32 -> vector<32x128xf32>
    %45 = arith.subf %35, %40 : vector<32x128xf32>
    %46 = math.absf %45 : vector<32x128xf32>
    %47 = arith.subf %35, %41 : vector<32x128xf32>
    %48 = math.absf %47 : vector<32x128xf32>
    %49 = arith.subf %35, %42 : vector<32x128xf32>
    %50 = math.absf %49 : vector<32x128xf32>
    %51 = math.absf %35 : vector<32x128xf32>
    %52 = arith.mulf %39, %5 : vector<32x128xf32>
    %53 = arith.mulf %46, %52 : vector<32x128xf32>
    %54 = arith.addf %39, %43 : vector<32x128xf32>
    %55 = arith.mulf %54, %9 : vector<32x128xf32>
    %56 = arith.mulf %48, %55 : vector<32x128xf32>
    %57 = arith.addf %53, %56 : vector<32x128xf32>
    %58 = arith.mulf %39, %9 : vector<32x128xf32>
    %59 = arith.mulf %44, %13 : vector<32x128xf32>
    %60 = arith.addf %58, %59 : vector<32x128xf32>
    %61 = arith.mulf %60, %5 : vector<32x128xf32>
    %62 = arith.mulf %50, %61 : vector<32x128xf32>
    %63 = arith.addf %57, %62 : vector<32x128xf32>
    %64 = arith.mulf %39, %31 : vector<32x128xf32>
    %65 = arith.mulf %51, %64 : vector<32x128xf32>
    %66 = arith.addf %63, %65 : vector<32x128xf32>
    %67 = arith.addf %32, %66 : vector<32x128xf32>
    %68 = arith.addf %32, %39 : vector<32x128xf32>
    %c1_i32_11 = arith.constant 1 : i32
    %69 = arith.index_cast %c1_i32_11 : i32 to index
    %c0_12 = arith.constant 0 : index
    %c0_13 = arith.constant 0 : index
    %70 = vector.load %arg1[%69, %c0_12, %c0_13] : memref<2x32x128xf32, #tpu.memory_space<vmem>>, vector<1x32x128xf32>
    %71 = vector.shape_cast %70 : vector<1x32x128xf32> to vector<32x128xf32>
    %72 = arith.index_cast %c1_i32_11 : i32 to index
    %c0_14 = arith.constant 0 : index
    %c0_15 = arith.constant 0 : index
    %73 = vector.load %arg2[%72, %c0_14, %c0_15] : memref<2x32x128xi8, #tpu.memory_space<vmem>>, vector<1x32x128xi8>
    %74 = vector.shape_cast %73 : vector<1x32x128xi8> to vector<32x128xi8>
    %75 = arith.sitofp %74 : vector<32x128xi8> to vector<32x128xf32>
    %c1_i32_16 = arith.constant 1 : i32
    %76 = tpu.dynamic_rotate %71 by %c1_i32_16 dim 1 : vector<32x128xf32>, i32 -> vector<32x128xf32>
    %c1_i32_17 = arith.constant 1 : i32
    %77 = tpu.dynamic_rotate %71 by %c1_i32_17 dim 0 : vector<32x128xf32>, i32 -> vector<32x128xf32>
    %c1_i32_18 = arith.constant 1 : i32
    %78 = tpu.dynamic_rotate %76 by %c1_i32_18 dim 0 : vector<32x128xf32>, i32 -> vector<32x128xf32>
    %c1_i32_19 = arith.constant 1 : i32
    %79 = tpu.dynamic_rotate %75 by %c1_i32_19 dim 0 : vector<32x128xf32>, i32 -> vector<32x128xf32>
    %c1_i32_20 = arith.constant 1 : i32
    %80 = tpu.dynamic_rotate %79 by %c1_i32_20 dim 1 : vector<32x128xf32>, i32 -> vector<32x128xf32>
    %81 = arith.subf %71, %76 : vector<32x128xf32>
    %82 = math.absf %81 : vector<32x128xf32>
    %83 = arith.subf %71, %77 : vector<32x128xf32>
    %84 = math.absf %83 : vector<32x128xf32>
    %85 = arith.subf %71, %78 : vector<32x128xf32>
    %86 = math.absf %85 : vector<32x128xf32>
    %87 = math.absf %71 : vector<32x128xf32>
    %88 = arith.mulf %75, %5 : vector<32x128xf32>
    %89 = arith.mulf %82, %88 : vector<32x128xf32>
    %90 = arith.addf %75, %79 : vector<32x128xf32>
    %91 = arith.mulf %90, %9 : vector<32x128xf32>
    %92 = arith.mulf %84, %91 : vector<32x128xf32>
    %93 = arith.addf %89, %92 : vector<32x128xf32>
    %94 = arith.mulf %75, %9 : vector<32x128xf32>
    %95 = arith.mulf %80, %13 : vector<32x128xf32>
    %96 = arith.addf %94, %95 : vector<32x128xf32>
    %97 = arith.mulf %96, %5 : vector<32x128xf32>
    %98 = arith.mulf %86, %97 : vector<32x128xf32>
    %99 = arith.addf %93, %98 : vector<32x128xf32>
    %100 = arith.mulf %75, %31 : vector<32x128xf32>
    %101 = arith.mulf %87, %100 : vector<32x128xf32>
    %102 = arith.addf %99, %101 : vector<32x128xf32>
    %103 = arith.addf %67, %102 : vector<32x128xf32>
    %104 = arith.addf %68, %75 : vector<32x128xf32>
    %c2_i32_21 = arith.constant 2 : i32
    %105 = vector.shape_cast %103 : vector<32x128xf32> to vector<1x32x128xf32>
    %cst_22 = arith.constant dense<0.000000e+00> : vector<1xf32>
    %106 = vector.multi_reduction <add>, %105, %cst_22 [1, 2] : vector<1x32x128xf32> to vector<1xf32>
    %107 = vector.shape_cast %106 : vector<1xf32> to vector<1x1x1xf32>
    %108 = vector.extract %107[0, 0, 0] : f32 from vector<1x1x1xf32>
    %109 = vector.shape_cast %104 : vector<32x128xf32> to vector<1x32x128xf32>
    %cst_23 = arith.constant dense<0.000000e+00> : vector<1xf32>
    %110 = vector.multi_reduction <add>, %109, %cst_23 [1, 2] : vector<1x32x128xf32> to vector<1xf32>
    %111 = vector.shape_cast %110 : vector<1xf32> to vector<1x1x1xf32>
    %112 = vector.extract %111[0, 0, 0] : f32 from vector<1x1x1xf32>
    %113 = tpu.iota {dimensions = array<i32: 1>} : vector<1x128xi32>
    %c0_i32_24 = arith.constant 0 : i32
    %114 = vector.broadcast %c0_i32_24 : i32 to vector<1x128xi32>
    %115 = arith.cmpi eq, %113, %114 : vector<1x128xi32>
    %cst_25 = arith.constant 0.000000e+00 : f32
    %116 = vector.broadcast %108 : f32 to vector<1x128xf32>
    %117 = vector.broadcast %cst_25 : f32 to vector<1x128xf32>
    %118 = arith.select %115, %116, %117 : vector<1x128xi1>, vector<1x128xf32>
    %c1_i32_26 = arith.constant 1 : i32
    %119 = vector.broadcast %c1_i32_26 : i32 to vector<1x128xi32>
    %120 = arith.cmpi eq, %113, %119 : vector<1x128xi32>
    %cst_27 = arith.constant 0.000000e+00 : f32
    %121 = vector.broadcast %112 : f32 to vector<1x128xf32>
    %122 = vector.broadcast %cst_27 : f32 to vector<1x128xf32>
    %123 = arith.select %120, %121, %122 : vector<1x128xi1>, vector<1x128xf32>
    %124 = arith.addf %118, %123 : vector<1x128xf32>
    %c0_28 = arith.constant 0 : index
    %c0_29 = arith.constant 0 : index
    %c0_30 = arith.constant 0 : index
    %125 = vector.load %arg3[%c0_28, %c0_29, %c0_30] : memref<1x1x128xf32, #tpu.memory_space<vmem>>, vector<1x1x128xf32>
    %126 = vector.shape_cast %125 : vector<1x1x128xf32> to vector<1x128xf32>
    %127 = vector.shape_cast %124 : vector<1x128xf32> to vector<1x1x128xf32>
    tpu.vector_store %arg3[%c0_28, %c0_29, %c0_30], %127 {strides = array<i32>} : memref<1x1x128xf32, #tpu.memory_space<vmem>>, vector<1x1x128xf32>,
    return
  }
  func.func @transform_0(%arg0: i32) -> (i32, i32, i32) {
    %c0_i32 = arith.constant 0 : i32
    %c0_i32_0 = arith.constant 0 : i32
    %c0_i32_1 = arith.constant 0 : i32
    return %arg0, %c0_i32, %c0_i32_0 : i32, i32, i32
  }
  func.func @transform_1(%arg0: i32) -> (i32, i32, i32) {
    %c0_i32 = arith.constant 0 : i32
    %c0_i32_0 = arith.constant 0 : i32
    %c0_i32_1 = arith.constant 0 : i32
    return %arg0, %c0_i32, %c0_i32_0 : i32, i32, i32
  }
  func.func @transform_2(%arg0: i32) -> (i32, i32, i32) {
    %c0_i32 = arith.constant 0 : i32
    %c0_i32_0 = arith.constant 0 : i32
    %c0_i32_1 = arith.constant 0 : i32
    return %arg0, %c0_i32, %c0_i32_0 : i32, i32, i32
  }
}

</mosaic_0001>

<llo_original>
// kernel: tpu_custom_call.1
$region0: #{tpu_custom_call.1}
  #allocation0 [shape = 'u32[]', space=smem, size = 0x4, offset = 0x4, fixed_abs, tag = 'smem constant byte address 0x4 - core index']
  #allocation1 [shape = 'u32[144,128]{1,0:T(1,128)}', space=vmem, size = 0x12000, scoped, tag = 'internal scratch']
  %s0 = inlined_call_operand.hbm [shape: f32[4,32,128], index: 0, kind: input, shape index: {}]
  %s1 = inlined_call_operand.hbm [shape: s8[4,32,128], index: 1, kind: input, shape index: {}]
  %s2 = inlined_call_operand.hbm [shape: f32[2,1,128], index: 2, kind: output, shape index: {}]
  %s3 = sld [smem:[#allocation0]]
  $region49: #{tpu_custom_call.1} parent=0
    _
  %s5 = ssub.s32 1, %s3
  %s6 = scalar_select 0, %s5, %s3
  $region1: #{tpu_custom_call.1} parent=0
    #allocation2 [shape = 'u8[65536]{0}', space=vmem, size = 0x10000, scoped, tag = 'input window, operand 0']
    #allocation3 [shape = 's32[2]{0}', space=sflag, size = 0x8, scoped, tag = 'scoped memory for tpu_custom_call.1']
    #allocation4 [shape = 's32[2]{0}', space=sflag, size = 0x8, scoped, tag = 'scoped memory for tpu_custom_call.1']
    #allocation5 [shape = 'u8[16384]{0}', space=vmem, size = 0x4000, scoped, tag = 'input window, operand 1']
    #allocation6 [shape = 's32[2]{0}', space=sflag, size = 0x8, scoped, tag = 'scoped memory for tpu_custom_call.1']
    #allocation7 [shape = 'u8[1024]{0}', space=vmem, size = 0x400, scoped, tag = 'output window, operand 0']
    %7 = vsyncpa [#allocation3], 0
    %s8 = scalar_lea.sflag [#allocation3], 1
    %9 = vsyncpa %s8, 0
    %10 = vsyncpa [#allocation6], 0
    %s11 = scalar_lea.sflag [#allocation6], 1
    %12 = vsyncpa %s11, 0
    %13 = vsyncpa [#allocation4], 0
    %s14 = scalar_lea.sflag [#allocation4], 1
    %15 = vsyncpa %s14, 0
    loop: start=0, step=1, limit=4
    $region2: #{tpu_custom_call.1} parent=1 // loop_pre_header
      _
    $region3: #{tpu_custom_call.1} parent=1 // loop_header
      %s17 = sphi 0, %s21
      %p18 = scmp.ge.s32.totalorder %s17, 4
      %s27 = sphi 0, %s29
      %s30 = sphi 0, %s27
      %s31 = sphi 0, %s30
      %s47 = sphi 0, %s31
      %s53 = sphi 0, %s55
      %s56 = sphi 0, %s53
      %s57 = sphi 0, %s56
      %s73 = sphi 0, %s57
      %s79 = sphi 0, %s81
      %s82 = sphi 0, %s79
      %s83 = sphi 0, %s82
      %s99 = sphi 0, %s83
    $region4: #{tpu_custom_call.1} parent=1 // loop_header_branch
      %20 = sbr.rel (%p18) target = $region8
    $region5: #{tpu_custom_call.1} parent=1 // loop_body
      %s22 = ssub.s32 %s17, 1
      %s23 = ssub.s32 %s17, 2
      %s24 = sadd.s32 %s17, 1
      %s25 = ssub.s32 %s17, %s24
      %p26 = scmp.eq.s32.totalorder %s25, 0
      %s28 = sadd.s32 %s27, 1
      %s29 = scalar_select %p26, %s27, %s28
      %p32 = pneg %p26
      %p33 = scmp.eq.s32.totalorder %s17, 1
      %p34 = por %p32, %p33
      %p35 = scmp.ne.s32.totalorder %s27, %s30
      %p36 = scmp.eq.s32.totalorder %s17, 0
      %p37 = por %p35, %p36
      %p38 = scmp.ne.s32.totalorder %s27, %s30
      %p39 = scmp.eq.s32.totalorder %s22, 1
      %p40 = por %p38, %p39
      %p41 = scmp.ne.s32.totalorder %s30, %s31
      %p42 = scmp.eq.s32.totalorder %s22, 0
      %p43 = por %p41, %p42
      %p44 = scmp.ne.s32.totalorder %s30, %s31
      %p45 = scmp.eq.s32.totalorder %s23, 1
      %p46 = por %p44, %p45
      %p48 = scmp.ne.s32.totalorder %s31, %s47
      %p49 = scmp.eq.s32.totalorder %s23, 0
      %p50 = por %p48, %p49
      %s51 = ssub.s32 %s17, %s24
      %p52 = scmp.eq.s32.totalorder %s51, 0
      %s54 = sadd.s32 %s53, 1
      %s55 = scalar_select %p52, %s53, %s54
      %p58 = pneg %p52
      %p59 = scmp.eq.s32.totalorder %s17, 1
      %p60 = por %p58, %p59
      %p61 = scmp.ne.s32.totalorder %s53, %s56
      %p62 = scmp.eq.s32.totalorder %s17, 0
      %p63 = por %p61, %p62
      %p64 = scmp.ne.s32.totalorder %s53, %s56
      %p65 = scmp.eq.s32.totalorder %s22, 1
      %p66 = por %p64, %p65
      %p67 = scmp.ne.s32.totalorder %s56, %s57
      %p68 = scmp.eq.s32.totalorder %s22, 0
      %p69 = por %p67, %p68
      %p70 = scmp.ne.s32.totalorder %s56, %s57
      %p71 = scmp.eq.s32.totalorder %s23, 1
      %p72 = por %p70, %p71
      %p74 = scmp.ne.s32.totalorder %s57, %s73
      %p75 = scmp.eq.s32.totalorder %s23, 0
      %p76 = por %p74, %p75
      %s77 = ssub.s32 %s17, %s24
      %p78 = scmp.eq.s32.totalorder %s77, 0
      %s80 = sadd.s32 %s79, 1
      %s81 = scalar_select %p78, %s79, %s80
      %p84 = pneg %p78
      %p85 = scmp.eq.s32.totalorder %s17, 1
      %p86 = por %p84, %p85
      %p87 = scmp.ne.s32.totalorder %s79, %s82
      %p88 = scmp.eq.s32.totalorder %s17, 0
      %p89 = por %p87, %p88
      %p90 = scmp.ne.s32.totalorder %s79, %s82
      %p91 = scmp.eq.s32.totalorder %s22, 1
      %p92 = por %p90, %p91
      %p93 = scmp.ne.s32.totalorder %s82, %s83
      %p94 = scmp.eq.s32.totalorder %s22, 0
      %p95 = por %p93, %p94
      %p96 = scmp.ne.s32.totalorder %s82, %s83
      %p97 = scmp.eq.s32.totalorder %s23, 1
      %p98 = por %p96, %p97
      %p100 = scmp.ne.s32.totalorder %s83, %s99
      %p101 = scmp.eq.s32.totalorder %s23, 0
      %p102 = por %p100, %p101
      %p103 = scmp.le.s32.totalorder 1, %s17
      %p104 = scmp.lt.s32.totalorder %s17, 3
      %p105 = pnand %p103, %p104
      %p106 = pneg %p105
      // Predicated region
      $region9: #{tpu_custom_call.1} parent=5 // pred_check
        _
      $region10: #{tpu_custom_call.1} parent=5 // pred_check_branch
        %108 = sbr.rel (%p105) target = $region12
      $region11: #{tpu_custom_call.1} parent=5 // pred_region
        %s109 = ssub.s32 %s17, 1
      $region12: #{tpu_custom_call.1} parent=5 // pred_fallthru
        _
      %p110 = scmp.lt.s32.totalorder %s17, 2
      // Predicated region
      $region13: #{tpu_custom_call.1} parent=5 // pred_check
        %p111 = pneg %p110
      $region14: #{tpu_custom_call.1} parent=5 // pred_check_branch
        %113 = sbr.rel (%p111) target = $region16
      $region15: #{tpu_custom_call.1} parent=5 // pred_region
        // Predicated region
        $region17: #{tpu_custom_call.1} parent=15 // pred_check
          %p114 = pneg %p37
        $region18: #{tpu_custom_call.1} parent=15 // pred_check_branch
          %116 = sbr.rel (%p114) target = $region20
        $region19: #{tpu_custom_call.1} parent=15 // pred_region
          %s117 = sand.u32 %s27, 1
          %s118 = scalar_lea.sflag [#allocation3], %s117
          %s119 = sand.u32 %s27, 1
          %s120 = smul.addr %s119, 64
          %s121 = scalar_lea.vmem [#allocation2], %s120
          %s122 = smul.u32 2, %s17
          %s124 = ssub.s32 1024, 1024
          %125 = vsyncadd %s118, %s124
          %s126 = smul.addr %s122, 4
          %s127 = smul.addr %s126, 128
          %s128 = scalar_lea.hbm %s0, %s127
          %s129 = sshll.u32 %s121, 4
          %s130 = int_to_ptr.vmem [resolvable:$true] %s129
          %135 = dma.hbm_to_vmem [thread:$0]  %s128, 1024, %s130, %s118, 128, 128, 8
        $region20: #{tpu_custom_call.1} parent=15 // pred_fallthru
          _
        // Predicated region
        $region21: #{tpu_custom_call.1} parent=15 // pred_check
          %p136 = pneg %p63
        $region22: #{tpu_custom_call.1} parent=15 // pred_check_branch
          %138 = sbr.rel (%p136) target = $region24
        $region23: #{tpu_custom_call.1} parent=15 // pred_region
          %s139 = sand.u32 %s53, 1
          %s140 = scalar_lea.sflag [#allocation6], %s139
          %s141 = sand.u32 %s53, 1
          %s142 = smul.addr %s141, 16
          %s143 = scalar_lea.vmem [#allocation5], %s142
          %s144 = smul.u32 2, %s17
          %s146 = ssub.s32 256, 256
          %147 = vsyncadd %s140, %s146
          %s148 = smul.addr %s144, 128
          %s149 = scalar_lea.hbm %s1, %s148
          %s150 = sshll.u32 %s143, 4
          %s151 = int_to_ptr.vmem [resolvable:$true] %s150
          %156 = dma.hbm_to_vmem [thread:$0]  %s149, 256, %s151, %s140, 128, 128, 8
        $region24: #{tpu_custom_call.1} parent=15 // pred_fallthru
          _
      $region16: #{tpu_custom_call.1} parent=5 // pred_fallthru
        _
      %p157 = scmp.le.s32.totalorder 1, %s17
      %p158 = scmp.lt.s32.totalorder %s17, 3
      %p159 = pnand %p157, %p158
      %p160 = pneg %p159
      // Predicated region
      $region25: #{tpu_custom_call.1} parent=5 // pred_check
        _
      $region26: #{tpu_custom_call.1} parent=5 // pred_check_branch
        %162 = sbr.rel (%p159) target = $region28
      $region27: #{tpu_custom_call.1} parent=5 // pred_region
        %s163 = ssub.s32 %s17, 1
        %s164 = sand.u32 %s30, 1
        %s165 = scalar_lea.sflag [#allocation3], %s164
        %s166 = sand.u32 %s30, 1
        %s167 = smul.addr %s166, 64
        %s168 = scalar_lea.vmem [#allocation2], %s167
        // Predicated region
        $region29: #{tpu_custom_call.1} parent=27 // pred_check
          %p169 = pneg %p43
        $region30: #{tpu_custom_call.1} parent=27 // pred_check_branch
          %171 = sbr.rel (%p169) target = $region32
        $region31: #{tpu_custom_call.1} parent=27 // pred_region
          %172 = dma.done %s165, 1024
        $region32: #{tpu_custom_call.1} parent=27 // pred_fallthru
          _
        %s173 = sand.u32 %s56, 1
        %s174 = scalar_lea.sflag [#allocation6], %s173
        %s175 = sand.u32 %s56, 1
        %s176 = smul.addr %s175, 16
        %s177 = scalar_lea.vmem [#allocation5], %s176
        // Predicated region
        $region33: #{tpu_custom_call.1} parent=27 // pred_check
          %p178 = pneg %p69
        $region34: #{tpu_custom_call.1} parent=27 // pred_check_branch
          %180 = sbr.rel (%p178) target = $region36
        $region35: #{tpu_custom_call.1} parent=27 // pred_region
          %181 = dma.done %s174, 256
        $region36: #{tpu_custom_call.1} parent=27 // pred_fallthru
          _
        %s182 = sand.u32 %s30, 1
        %s183 = scalar_lea.sflag [#allocation3], %s182
        %s184 = sand.u32 %s30, 1
        %s185 = smul.addr %s184, 64
        %s186 = scalar_lea.vmem [#allocation2], %s185
        %p187 = pneg %p43
        %p188 = pneg %p40
        %s189 = sand.u32 %s56, 1
        %s190 = scalar_lea.sflag [#allocation6], %s189
        %s191 = sand.u32 %s56, 1
        %s192 = smul.addr %s191, 16
        %s193 = scalar_lea.vmem [#allocation5], %s192
        %p194 = pneg %p69
        %p195 = pneg %p66
        %p196 = pneg %p95
        %p197 = pneg %p92
        %s198 = sand.u32 %s82, 1
        %s199 = scalar_lea.sflag [#allocation4], %s198
        %s200 = sand.u32 %s82, 1
        %s201 = scalar_lea.vmem [#allocation7], %s200
        %s202 = smul.u32 2, %s22
        %s203 = smul.u32 2, %s22
        %v204 = vlaneseq
        %v205 = vshrl.u32 %v204, 7
        %v206 = vadd.s32 %v205, 8
        %v207 = vadd.s32 %v205, 16
        %v208 = vadd.s32 %v205, 24
        %v209 = vlaneseq
        %v210 = vand.u32 %v209, 127
        %vm211 = vcmp.ge.s32.totalorder %v210, 1
        %v212 = vsel %vm211, 1, 0
        %v213 = vcvt.s32.f32 %v212
        %vm214 = vcmp.ge.s32.totalorder %v205, 1
        %vm215 = vcmp.ge.s32.totalorder %v206, 1
        %vm216 = vcmp.ge.s32.totalorder %v207, 1
        %vm217 = vcmp.ge.s32.totalorder %v208, 1
        %v218 = vsel %vm214, 1, 0
        %v219 = vsel %vm215, 1, 0
        %v220 = vsel %vm216, 1, 0
        %v221 = vsel %vm217, 1, 0
        %v222 = vcvt.s32.f32 %v218
        %v223 = vcvt.s32.f32 %v219
        %v224 = vcvt.s32.f32 %v220
        %v225 = vcvt.s32.f32 %v221
        %vm226 = vcmp.ge.s32.totalorder %v205, 2
        %vm227 = vcmp.ge.s32.totalorder %v206, 2
        %vm228 = vcmp.ge.s32.totalorder %v207, 2
        %vm229 = vcmp.ge.s32.totalorder %v208, 2
        %v230 = vsel %vm226, 1, 0
        %v231 = vsel %vm227, 1, 0
        %v232 = vsel %vm228, 1, 0
        %v233 = vsel %vm229, 1, 0
        %v234 = vcvt.s32.f32 %v230
        %v235 = vcvt.s32.f32 %v231
        %v236 = vcvt.s32.f32 %v232
        %v237 = vcvt.s32.f32 %v233
        %vm238 = vcmp.le.s32.totalorder %v205, 30
        %vm239 = vcmp.le.s32.totalorder %v206, 30
        %vm240 = vcmp.le.s32.totalorder %v207, 30
        %vm241 = vcmp.le.s32.totalorder %v208, 30
        %vm242 = vmand %vm214, %vm238
        %vm243 = vmand %vm215, %vm239
        %vm244 = vmand %vm216, %vm240
        %vm245 = vmand %vm217, %vm241
        %v246 = vsel %vm242, 1, 0
        %v247 = vsel %vm243, 1, 0
        %v248 = vsel %vm244, 1, 0
        %v249 = vsel %vm245, 1, 0
        %v250 = vcvt.s32.f32 %v246
        %v251 = vcvt.s32.f32 %v247
        %v252 = vcvt.s32.f32 %v248
        %v253 = vcvt.s32.f32 %v249
        %vm254 = vcmp.eq.s32.totalorder %v210, 0
        %v255 = vsel %vm254, 1, 0
        %v256 = vcvt.s32.f32 %v255
        %vm257 = vcmp.eq.s32.totalorder %v210, 127
        %v258 = vsel %vm257, 1, 0
        %v259 = vcvt.s32.f32 %v258
        %v260 = vadd.f32 %v256, %v259
        %v261 = vmul.f32 %v250, %v260
        %v262 = vmul.f32 %v251, %v260
        %v263 = vmul.f32 %v252, %v260
        %v264 = vmul.f32 %v253, %v260
        %v265 = vadd.f32 %v259, %v261
        %v266 = vadd.f32 %v259, %v262
        %v267 = vadd.f32 %v259, %v263
        %v268 = vadd.f32 %v259, %v264
        %v269 = vld [vmem:[%s168] sm:$0xff]
        %v270 = vld [vmem:[%s168 + $0x8] sm:$0xff]
        %v271 = vld [vmem:[%s168 + $0x10] sm:$0xff]
        %v272 = vld [vmem:[%s168 + $0x18] sm:$0xff]
        %v273 = vld [vmem:[%s177] sm:$0xff]
        %v274 = vunpack.c.0.s8 %v273
        %v275 = vunpack.c.1.s8 %v273
        %v276 = vunpack.c.2.s8 %v273
        %v277 = vunpack.c.3.s8 %v273
        %v278 = vcvt.s32.f32 %v274
        %v279 = vcvt.s32.f32 %v275
        %v280 = vcvt.s32.f32 %v276
        %v281 = vcvt.s32.f32 %v277
        %282 = vrot.lane.b32.xlu0 %v269, 1
        %v283 = vpop.permute.xlu0 %282
        %284 = vrot.lane.b32.xlu0 %v270, 1
        %v285 = vpop.permute.xlu0 %284
        %286 = vrot.lane.b32.xlu0 %v271, 1
        %v287 = vpop.permute.xlu0 %286
        %288 = vrot.lane.b32.xlu0 %v272, 1
        %v289 = vpop.permute.xlu0 %288
        %v290 = vrot.slane %v269, 7
        %v291 = vrot.slane %v270, 7
        %v292 = vrot.slane %v271, 7
        %v293 = vrot.slane %v272, 7
        %vm294 = vcmp.lt.s32.totalorder %v205, 1
        %v295 = vsel %vm294, %v292, %v293
        %v296 = vsel %vm294, %v291, %v292
        %v297 = vsel %vm294, %v290, %v291
        %v298 = vsel %vm294, %v293, %v290
        %v299 = vrot.slane %v283, 7
        %v300 = vrot.slane %v285, 7
        %v301 = vrot.slane %v287, 7
        %v302 = vrot.slane %v289, 7
        %v303 = vsel %vm294, %v301, %v302
        %v304 = vsel %vm294, %v300, %v301
        %v305 = vsel %vm294, %v299, %v300
        %v306 = vsel %vm294, %v302, %v299
        %v307 = vrot.slane %v278, 7
        %v308 = vrot.slane %v279, 7
        %v309 = vrot.slane %v280, 7
        %v310 = vrot.slane %v281, 7
        %v311 = vsel %vm294, %v309, %v310
        %v312 = vsel %vm294, %v308, %v309
        %v313 = vsel %vm294, %v307, %v308
        %v314 = vsel %vm294, %v310, %v307
        %315 = vrot.lane.b32.xlu0 %v314, 1
        %v316 = vpop.permute.xlu0 %315
        %317 = vrot.lane.b32.xlu0 %v313, 1
        %v318 = vpop.permute.xlu0 %317
        %319 = vrot.lane.b32.xlu0 %v312, 1
        %v320 = vpop.permute.xlu0 %319
        %321 = vrot.lane.b32.xlu0 %v311, 1
        %v322 = vpop.permute.xlu0 %321
        %v323 = vsub.f32 %v269, %v283
        %v324 = vsub.f32 %v270, %v285
        %v325 = vsub.f32 %v271, %v287
        %v326 = vsub.f32 %v272, %v289
        %v327 = vand.u32 2147483647, %v323
        %v328 = vand.u32 2147483647, %v324
        %v329 = vand.u32 2147483647, %v325
        %v330 = vand.u32 2147483647, %v326
        %v331 = vsub.f32 %v269, %v298
        %v332 = vsub.f32 %v270, %v297
        %v333 = vsub.f32 %v271, %v296
        %v334 = vsub.f32 %v272, %v295
        %v335 = vand.u32 2147483647, %v331
        %v336 = vand.u32 2147483647, %v332
        %v337 = vand.u32 2147483647, %v333
        %v338 = vand.u32 2147483647, %v334
        %v339 = vsub.f32 %v269, %v306
        %v340 = vsub.f32 %v270, %v305
        %v341 = vsub.f32 %v271, %v304
        %v342 = vsub.f32 %v272, %v303
        %v343 = vand.u32 2147483647, %v339
        %v344 = vand.u32 2147483647, %v340
        %v345 = vand.u32 2147483647, %v341
        %v346 = vand.u32 2147483647, %v342
        %v347 = vand.u32 2147483647, %v269
        %v348 = vand.u32 2147483647, %v270
        %v349 = vand.u32 2147483647, %v271
        %v350 = vand.u32 2147483647, %v272
        %v351 = vmul.f32 %v278, %v213
        %v352 = vmul.f32 %v279, %v213
        %v353 = vmul.f32 %v280, %v213
        %v354 = vmul.f32 %v281, %v213
        %v355 = vmul.f32 %v327, %v351
        %v356 = vmul.f32 %v328, %v352
        %v357 = vmul.f32 %v329, %v353
        %v358 = vmul.f32 %v330, %v354
        %v359 = vadd.f32 %v278, %v314
        %v360 = vadd.f32 %v279, %v313
        %v361 = vadd.f32 %v280, %v312
        %v362 = vadd.f32 %v281, %v311
        %v363 = vmul.f32 %v359, %v222
        %v364 = vmul.f32 %v360, %v223
        %v365 = vmul.f32 %v361, %v224
        %v366 = vmul.f32 %v362, %v225
        %v367 = vmul.f32 %v335, %v363
        %v368 = vmul.f32 %v336, %v364
        %v369 = vmul.f32 %v337, %v365
        %v370 = vmul.f32 %v338, %v366
        %v371 = vadd.f32 %v355, %v367
        %v372 = vadd.f32 %v356, %v368
        %v373 = vadd.f32 %v357, %v369
        %v374 = vadd.f32 %v358, %v370
        %v375 = vmul.f32 %v278, %v222
        %v376 = vmul.f32 %v279, %v223
        %v377 = vmul.f32 %v280, %v224
        %v378 = vmul.f32 %v281, %v225
        %v379 = vmul.f32 %v316, %v234
        %v380 = vmul.f32 %v318, %v235
        %v381 = vmul.f32 %v320, %v236
        %v382 = vmul.f32 %v322, %v237
        %v383 = vadd.f32 %v375, %v379
        %v384 = vadd.f32 %v376, %v380
        %v385 = vadd.f32 %v377, %v381
        %v386 = vadd.f32 %v378, %v382
        %v387 = vmul.f32 %v383, %v213
        %v388 = vmul.f32 %v384, %v213
        %v389 = vmul.f32 %v385, %v213
        %v390 = vmul.f32 %v386, %v213
        %v391 = vmul.f32 %v343, %v387
        %v392 = vmul.f32 %v344, %v388
        %v393 = vmul.f32 %v345, %v389
        %v394 = vmul.f32 %v346, %v390
        %v395 = vadd.f32 %v371, %v391
        %v396 = vadd.f32 %v372, %v392
        %v397 = vadd.f32 %v373, %v393
        %v398 = vadd.f32 %v374, %v394
        %v399 = vmul.f32 %v278, %v265
        %v400 = vmul.f32 %v279, %v266
        %v401 = vmul.f32 %v280, %v267
        %v402 = vmul.f32 %v281, %v268
        %v403 = vmul.f32 %v347, %v399
        %v404 = vmul.f32 %v348, %v400
        %v405 = vmul.f32 %v349, %v401
        %v406 = vmul.f32 %v350, %v402
        %v407 = vadd.f32 %v395, %v403
        %v408 = vadd.f32 %v396, %v404
        %v409 = vadd.f32 %v397, %v405
        %v410 = vadd.f32 %v398, %v406
        %v411 = vadd.f32 %v407, 0.0
        %v412 = vadd.f32 %v408, 0.0
        %v413 = vadd.f32 %v409, 0.0
        %v414 = vadd.f32 %v410, 0.0
        %v415 = vadd.f32 %v278, 0.0
        %v416 = vadd.f32 %v279, 0.0
        %v417 = vadd.f32 %v280, 0.0
        %v418 = vadd.f32 %v281, 0.0
        %s419 = scalar_lea.vmem %s168, 32 [#allocation2]
        %v420 = vld [vmem:[%s419] sm:$0xff]
        %v421 = vld [vmem:[%s419 + $0x8] sm:$0xff]
        %v422 = vld [vmem:[%s419 + $0x10] sm:$0xff]
        %v423 = vld [vmem:[%s419 + $0x18] sm:$0xff]
        %s424 = scalar_lea.vmem %s177, 8 [#allocation5]
        %v425 = vld [vmem:[%s424] sm:$0xff]
        %v426 = vunpack.c.0.s8 %v425
        %v427 = vunpack.c.1.s8 %v425
        %v428 = vunpack.c.2.s8 %v425
        %v429 = vunpack.c.3.s8 %v425
        %v430 = vcvt.s32.f32 %v426
        %v431 = vcvt.s32.f32 %v427
        %v432 = vcvt.s32.f32 %v428
        %v433 = vcvt.s32.f32 %v429
        %434 = vrot.lane.b32.xlu0 %v420, 1
        %v435 = vpop.permute.xlu0 %434
        %436 = vrot.lane.b32.xlu0 %v421, 1
        %v437 = vpop.permute.xlu0 %436
        %438 = vrot.lane.b32.xlu0 %v422, 1
        %v439 = vpop.permute.xlu0 %438
        %440 = vrot.lane.b32.xlu0 %v423, 1
        %v441 = vpop.permute.xlu0 %440
        %v442 = vrot.slane %v420, 7
        %v443 = vrot.slane %v421, 7
        %v444 = vrot.slane %v422, 7
        %v445 = vrot.slane %v423, 7
        %v446 = vsel %vm294, %v444, %v445
        %v447 = vsel %vm294, %v443, %v444
        %v448 = vsel %vm294, %v442, %v443
        %v449 = vsel %vm294, %v445, %v442
        %v450 = vrot.slane %v435, 7
        %v451 = vrot.slane %v437, 7
        %v452 = vrot.slane %v439, 7
        %v453 = vrot.slane %v441, 7
        %v454 = vsel %vm294, %v452, %v453
        %v455 = vsel %vm294, %v451, %v452
        %v456 = vsel %vm294, %v450, %v451
        %v457 = vsel %vm294, %v453, %v450
        %v458 = vrot.slane %v430, 7
        %v459 = vrot.slane %v431, 7
        %v460 = vrot.slane %v432, 7
        %v461 = vrot.slane %v433, 7
        %v462 = vsel %vm294, %v460, %v461
        %v463 = vsel %vm294, %v459, %v460
        %v464 = vsel %vm294, %v458, %v459
        %v465 = vsel %vm294, %v461, %v458
        %466 = vrot.lane.b32.xlu0 %v465, 1
        %v467 = vpop.permute.xlu0 %466
        %468 = vrot.lane.b32.xlu0 %v464, 1
        %v469 = vpop.permute.xlu0 %468
        %470 = vrot.lane.b32.xlu0 %v463, 1
        %v471 = vpop.permute.xlu0 %470
        %472 = vrot.lane.b32.xlu0 %v462, 1
        %v473 = vpop.permute.xlu0 %472
        %v474 = vsub.f32 %v420, %v435
        %v475 = vsub.f32 %v421, %v437
        %v476 = vsub.f32 %v422, %v439
        %v477 = vsub.f32 %v423, %v441
        %v478 = vand.u32 2147483647, %v474
        %v479 = vand.u32 2147483647, %v475
        %v480 = vand.u32 2147483647, %v476
        %v481 = vand.u32 2147483647, %v477
        %v482 = vsub.f32 %v420, %v449
        %v483 = vsub.f32 %v421, %v448
        %v484 = vsub.f32 %v422, %v447
        %v485 = vsub.f32 %v423, %v446
        %v486 = vand.u32 2147483647, %v482
        %v487 = vand.u32 2147483647, %v483
        %v488 = vand.u32 2147483647, %v484
        %v489 = vand.u32 2147483647, %v485
        %v490 = vsub.f32 %v420, %v457
        %v491 = vsub.f32 %v421, %v456
        %v492 = vsub.f32 %v422, %v455
        %v493 = vsub.f32 %v423, %v454
        %v494 = vand.u32 2147483647, %v490
        %v495 = vand.u32 2147483647, %v491
        %v496 = vand.u32 2147483647, %v492
        %v497 = vand.u32 2147483647, %v493
        %v498 = vand.u32 2147483647, %v420
        %v499 = vand.u32 2147483647, %v421
        %v500 = vand.u32 2147483647, %v422
        %v501 = vand.u32 2147483647, %v423
        %v502 = vmul.f32 %v430, %v213
        %v503 = vmul.f32 %v431, %v213
        %v504 = vmul.f32 %v432, %v213
        %v505 = vmul.f32 %v433, %v213
        %v506 = vmul.f32 %v478, %v502
        %v507 = vmul.f32 %v479, %v503
        %v508 = vmul.f32 %v480, %v504
        %v509 = vmul.f32 %v481, %v505
        %v510 = vadd.f32 %v430, %v465
        %v511 = vadd.f32 %v431, %v464
        %v512 = vadd.f32 %v432, %v463
        %v513 = vadd.f32 %v433, %v462
        %v514 = vmul.f32 %v510, %v222
        %v515 = vmul.f32 %v511, %v223
        %v516 = vmul.f32 %v512, %v224
        %v517 = vmul.f32 %v513, %v225
        %v518 = vmul.f32 %v486, %v514
        %v519 = vmul.f32 %v487, %v515
        %v520 = vmul.f32 %v488, %v516
        %v521 = vmul.f32 %v489, %v517
        %v522 = vadd.f32 %v506, %v518
        %v523 = vadd.f32 %v507, %v519
        %v524 = vadd.f32 %v508, %v520
        %v525 = vadd.f32 %v509, %v521
        %v526 = vmul.f32 %v430, %v222
        %v527 = vmul.f32 %v431, %v223
        %v528 = vmul.f32 %v432, %v224
        %v529 = vmul.f32 %v433, %v225
        %v530 = vmul.f32 %v467, %v234
        %v531 = vmul.f32 %v469, %v235
        %v532 = vmul.f32 %v471, %v236
        %v533 = vmul.f32 %v473, %v237
        %v534 = vadd.f32 %v526, %v530
        %v535 = vadd.f32 %v527, %v531
        %v536 = vadd.f32 %v528, %v532
        %v537 = vadd.f32 %v529, %v533
        %v538 = vmul.f32 %v534, %v213
        %v539 = vmul.f32 %v535, %v213
        %v540 = vmul.f32 %v536, %v213
        %v541 = vmul.f32 %v537, %v213
        %v542 = vmul.f32 %v494, %v538
        %v543 = vmul.f32 %v495, %v539
        %v544 = vmul.f32 %v496, %v540
        %v545 = vmul.f32 %v497, %v541
        %v546 = vadd.f32 %v522, %v542
        %v547 = vadd.f32 %v523, %v543
        %v548 = vadd.f32 %v524, %v544
        %v549 = vadd.f32 %v525, %v545
        %v550 = vmul.f32 %v430, %v265
        %v551 = vmul.f32 %v431, %v266
        %v552 = vmul.f32 %v432, %v267
        %v553 = vmul.f32 %v433, %v268
        %v554 = vmul.f32 %v498, %v550
        %v555 = vmul.f32 %v499, %v551
        %v556 = vmul.f32 %v500, %v552
        %v557 = vmul.f32 %v501, %v553
        %v558 = vadd.f32 %v546, %v554
        %v559 = vadd.f32 %v547, %v555
        %v560 = vadd.f32 %v548, %v556
        %v561 = vadd.f32 %v549, %v557
        %v562 = vadd.f32 %v411, %v558
        %v563 = vadd.f32 %v412, %v559
        %v564 = vadd.f32 %v413, %v560
        %v565 = vadd.f32 %v414, %v561
        %v566 = vadd.f32 %v415, %v430
        %v567 = vadd.f32 %v416, %v431
        %v568 = vadd.f32 %v417, %v432
        %v569 = vadd.f32 %v418, %v433
        %v570 = vadd.f32 %v562, %v563
        %v571 = vadd.f32 %v570, %v564
        %v572 = vadd.f32 %v571, %v565
        %573 = vadd.xlane.f32.xlu0 %v572
        %v574 = vpop.xlane.xlu0 %573
        %v575 = vrot.slane %v574, 4
        %v576 = vadd.f32 %v574, %v575
        %v577 = vrot.slane %v576, 2
        %v578 = vadd.f32 %v576, %v577
        %v579 = vrot.slane %v578, 1
        %v580 = vadd.f32 %v578, %v579
        %s581 = vtos %v580
        %v582 = vadd.f32 %v566, %v567
        %v583 = vadd.f32 %v582, %v568
        %v584 = vadd.f32 %v583, %v569
        %585 = vadd.xlane.f32.xlu0 %v584
        %v586 = vpop.xlane.xlu0 %585
        %v587 = vrot.slane %v586, 4
        %v588 = vadd.f32 %v586, %v587
        %v589 = vrot.slane %v588, 2
        %v590 = vadd.f32 %v588, %v589
        %v591 = vrot.slane %v590, 1
        %v592 = vadd.f32 %v590, %v591
        %s593 = vtos %v592
        %v594 = vstv %s581
        %v595 = vsel %vm254, %v594, 0.0
        %vm596 = vcmp.eq.s32.totalorder %v210, 1
        %v597 = vstv %s593
        %v598 = vsel %vm596, %v597, 0.0
        %v599 = vadd.f32 %v595, %v598
        %600 = vst [vmem:[%s201] sm:$0x1] %v599
        %s601 = sand.u32 %s82, 1
        %s602 = scalar_lea.sflag [#allocation4], %s601
        %s603 = sand.u32 %s82, 1
        %s604 = scalar_lea.vmem [#allocation7], %s603
        // Predicated region
        $region37: #{tpu_custom_call.1} parent=27 // pred_check
          %p605 = pneg %p92
        $region38: #{tpu_custom_call.1} parent=27 // pred_check_branch
          %607 = sbr.rel (%p605) target = $region40
        $region39: #{tpu_custom_call.1} parent=27 // pred_region
          %s609 = ssub.s32 16, 16
          %610 = vsyncadd %s602, %s609
          %s611 = smul.addr %s22, 16
          %s612 = scalar_lea.hbm %s2, %s611
          %s614 = sshll.u32 %s604, 4
          %s615 = int_to_ptr.vmem [resolvable:$true] %s614
          %617 = dma.vmem_to_hbm [thread:$0]  %s615, 16, %s612, %s602
        $region40: #{tpu_custom_call.1} parent=27 // pred_fallthru
          _
      $region28: #{tpu_custom_call.1} parent=5 // pred_fallthru
        _
      %p618 = scmp.le.s32.totalorder 2, %s17
      // Predicated region
      $region41: #{tpu_custom_call.1} parent=5 // pred_check
        %p619 = pneg %p618
      $region42: #{tpu_custom_call.1} parent=5 // pred_check_branch
        %621 = sbr.rel (%p619) target = $region44
      $region43: #{tpu_custom_call.1} parent=5 // pred_region
        %s622 = ssub.s32 %s17, 2
        // Predicated region
        $region45: #{tpu_custom_call.1} parent=43 // pred_check
          %p623 = pneg %p98
        $region46: #{tpu_custom_call.1} parent=43 // pred_check_branch
          %625 = sbr.rel (%p623) target = $region48
        $region47: #{tpu_custom_call.1} parent=43 // pred_region
          %s626 = sand.u32 %s83, 1
          %s627 = scalar_lea.sflag [#allocation4], %s626
          %s628 = sand.u32 %s83, 1
          %s629 = scalar_lea.vmem [#allocation7], %s628
          %630 = dma.done %s627, 16
        $region48: #{tpu_custom_call.1} parent=43 // pred_fallthru
          _
      $region44: #{tpu_custom_call.1} parent=5 // pred_fallthru
        _
    $region6: #{tpu_custom_call.1} parent=1 // loop_footer
      %s21 = sadd.s32 1, %s17
    $region7: #{tpu_custom_call.1} parent=1 // loop_footer_branch
      %16 = sbr.rel target = $region3
    $region8: #{tpu_custom_call.1} parent=1 // loop_exit
      _
    %631 = vsyncpa [#allocation3], 1
    %s632 = scalar_lea.sflag [#allocation3], 1
    %633 = vsyncpa %s632, 1
    %634 = vsyncpa [#allocation6], 1
    %s635 = scalar_lea.sflag [#allocation6], 1
    %636 = vsyncpa %s635, 1
    %637 = vsyncpa [#allocation4], 1
    %s638 = scalar_lea.sflag [#allocation4], 1
    %639 = vsyncpa %s638, 1

</llo_original>
